<compile_context>
chip_gen: v6e
topology: v6e:2x2x1
jax: 0.10.0
libtpu: 0.0.40
codegen_flags: <defaults>
</compile_context>

<pallas_src>
import functools

import jax
import jax.numpy as jnp
from jax.experimental import pallas as pl
from jax.experimental.pallas import tpu as pltpu


def _proj_kernel(x_ref, w_ref, b_ref, o_ref):
    # One (tm, K) x (K, D) tile: out = x @ w + b. f32 accumulation on the MXU;
    # bias is already f32 (cast once in the wrapper).
    acc = jnp.dot(x_ref[...], w_ref[...], preferred_element_type=jnp.float32)
    o_ref[...] = (acc + b_ref[...]).astype(o_ref.dtype)


def _choose_tile_m(M, block_m, per_row_bytes, resident_bytes, vmem_limit_bytes):
    """Pick the M tile: VMEM-aware, divisor-of-M preferred, multiple of 8."""
    budget = int(0.85 * vmem_limit_bytes) - resident_bytes
    cap = max(8, budget // per_row_bytes) if budget > 0 else 8
    tm_max = max(8, min(block_m, cap))
    if M <= tm_max:
        # Whole problem fits in one tile. Split in two when M is big enough so
        # the "parallel" grid axis can occupy both TensorCores on v7x.
        if M >= 512 and M % 16 == 0:
            return M // 2
        return M
    # Largest multiple of 8 that divides M exactly, up to tm_max.
    t = (tm_max // 8) * 8
    while t >= 8:
        if M % t == 0:
            return t
        t -= 8
    # No clean divisor: fall back to cdiv padding with a multiple-of-8 tile.
    return max(8, (tm_max // 8) * 8)


def patch_embed(x, weight, bias, patch_size, *, flatten_embedding=True,
                block_m=None, compute_dtype=jnp.bfloat16, out_dtype=None,
                fuse_patchify=False, vmem_limit_bytes=48 * 1024 * 1024):
    """PatchEmbed forward.

    x:      (B, C, H, W) NCHW image batch.
    weight: (D, C, pH, pW) Conv2d weight (kernel == stride == patch).
    bias:   (D,) Conv2d bias.
    Returns (B, N, D) if flatten_embedding else (B, Hp, Wp, D).
    """
    B, C, H, W = x.shape
    pH, pW = patch_size
    assert H % pH == 0 and W % pW == 0
    Hp, Wp = H // pH, W // pW
    N = Hp * Wp
    D = weight.shape[0]
    K = C * pH * pW
    M = B * N

    cdtype = jnp.dtype(compute_dtype) if compute_dtype is not None else jnp.dtype(x.dtype)
    odtype = jnp.dtype(out_dtype) if out_dtype is not None else jnp.dtype(x.dtype)

    # Cast BEFORE the relayout so the materialized (or fused) patchify pass
    # moves compute_dtype bytes, not f32 bytes.
    x_c = x.astype(cdtype)

    # Patchify: (B,C,Hp,pH,Wp,pW) -> (B,Hp,Wp,C,pH,pW) -> (M, K).
    # Flattening order (C, pH, pW) matches the PyTorch Conv2d weight layout.
    patches = x_c.reshape(B, C, Hp, pH, Wp, pW).transpose(0, 2, 4, 1, 3, 5)
    patches = patches.reshape(M, K)

    # Conv weight (D, C, pH, pW) -> (K, D) for right-multiplication.
    w2d = weight.astype(cdtype).reshape(D, K).T
    # Bias in f32 once; kernel adds it directly to the f32 accumulator.
    b2d = bias.astype(jnp.float32).reshape(1, D)

    # --- tile selection -----------------------------------------------------
    in_bytes = cdtype.itemsize
    out_bytes = odtype.itemsize
    if block_m is None:
        block_m = 2048 if in_bytes <= 2 else 1024
    # Double-buffered streaming operands (patches tile in, output tile out)
    # plus the resident weight/bias (Pallas still allocates 2 buffers each).
    per_row = 2 * K * in_bytes + 2 * D * out_bytes
    resident = 2 * K * D * in_bytes + 2 * D * 4
    tm = _choose_tile_m(M, block_m, per_row, resident, vmem_limit_bytes)
    grid_m = pl.cdiv(M, tm)

    cost = pl.CostEstimate(
        flops=2 * M * K * D,
        transcendentals=0,
        bytes_accessed=(M * K * in_bytes + K * D * in_bytes
                        + D * 4 + M * D * out_bytes),
    )

    compiler_params = pltpu.CompilerParams(
        # Independent M tiles -> shard across both TensorCores on v7x.
        dimension_semantics=("parallel",),
        # Explicit scoped-VMEM limit: v5e defaults to 16 MiB (too small for
        # large tm at ViT-g-class D); 48 MiB leaves headroom under v7x's
        # 64 MiB physical VMEM and is trivially fine on v5e/v6e (128 MiB).
        vmem_limit_bytes=vmem_limit_bytes,
        # Only ask XLA to fuse the patchify transpose into input 0's DMA when
        # explicitly requested (measured decision per generation).
        allow_input_fusion=[True, False, False] if fuse_patchify else None,
    )

    out = pl.pallas_call(
        _proj_kernel,
        out_shape=jax.ShapeDtypeStruct((M, D), odtype),
        grid_spec=pltpu.PrefetchScalarGridSpec(
            num_scalar_prefetch=0,
            grid=(grid_m,),
            in_specs=[
                # Patches tile streams over M; weight & bias stay resident in
                # VMEM (constant block index -> no re-DMA per step).
                pl.BlockSpec((tm, K), lambda i: (i, 0)),
                pl.BlockSpec((K, D), lambda i: (0, 0)),
                pl.BlockSpec((1, D), lambda i: (0, 0)),
            ],
            out_specs=pl.BlockSpec((tm, D), lambda i: (i, 0)),
        ),
        compiler_params=compiler_params,
        cost_estimate=cost,
    )(patches, w2d, b2d)

    out = out.reshape(B, N, D)
    if not flatten_embedding:
        out = out.reshape(B, Hp, Wp, D)
    return out


if __name__ == "__main__":
    # Small shapes consistent with the module: B=2, C=4, img=16, patch=4, D=32.
    B, C, IMG, P, D = 2, 4, 16, 4, 32
    key = jax.random.PRNGKey(0)
    kx, kw, kb = jax.random.split(key, 3)

    x = jax.random.normal(kx, (B, C, IMG, IMG), dtype=jnp.float32)
    weight = 0.02 * jax.random.normal(kw, (D, C, P, P), dtype=jnp.float32)
    bias = 0.01 * jax.random.normal(kb, (D,), dtype=jnp.float32)

    # Reference: plain-JAX conv-as-matmul (same math as PyTorch Conv2d with
    # kernel=stride=patch, then flatten(2).transpose(1, 2)), all in f32.
    Hp = Wp = IMG // P
    patches_ref = x.reshape(B, C, Hp, P, Wp, P).transpose(0, 2, 4, 1, 3, 5)
    patches_ref = patches_ref.reshape(B, Hp * Wp, C * P * P)
    ref = jnp.einsum("bnk,dk->bnd", patches_ref, weight.reshape(D, -1)) + bias

    # 1) f32 compute path — bit-faithful to the PyTorch module, tight tol.
    out_f32 = jax.block_until_ready(
        patch_embed(x, weight, bias, (P, P), compute_dtype=jnp.float32))
    assert out_f32.shape == (B, Hp * Wp, D)
    assert jnp.allclose(out_f32, ref, atol=1e-5, rtol=1e-5)

    # 2) default mixed-precision path (bf16 inputs, f32 MXU accumulation).
    fwd = jax.jit(functools.partial(patch_embed, patch_size=(P, P)))
    out_def = jax.block_until_ready(fwd(x, weight, bias))
    assert out_def.dtype == x.dtype
    assert jnp.allclose(out_def, ref, atol=2e-2, rtol=2e-2)

    # 3) multi-tile pipelined grid path (small block_m exercises streaming).
    out_tiled = jax.block_until_ready(
        patch_embed(x, weight, bias, (P, P), block_m=16))
    assert jnp.allclose(out_tiled, ref, atol=2e-2, rtol=2e-2)

    # 4) bf16 output path (halves the (M, D) write stream).
    out_bf = jax.block_until_ready(
        patch_embed(x, weight, bias, (P, P), out_dtype=jnp.bfloat16))
    assert out_bf.dtype == jnp.bfloat16
    assert jnp.allclose(out_bf.astype(jnp.float32), ref, atol=5e-2, rtol=5e-2)

    # 5) non-flattened output path.
    out_grid = jax.block_until_ready(
        patch_embed(x, weight, bias, (P, P), flatten_embedding=False))
    assert out_grid.shape == (B, Hp, Wp, D)
    assert jnp.allclose(out_grid.reshape(B, Hp * Wp, D), ref,
                        atol=2e-2, rtol=2e-2)

    # 6) fused-patchify variant (allow_input_fusion) — the alternative HBM
    #    path that should be benchmarked per generation.
    out_fused = jax.block_until_ready(
        patch_embed(x, weight, bias, (P, P), fuse_patchify=True))
    assert jnp.allclose(out_fused, ref, atol=2e-2, rtol=2e-2)

    print("KERNEL_OK")
</pallas_src>

<mosaic_0001>
module attributes {stable_mosaic.version = 11 : i64} {
  func.func @_proj_kernel(%arg0: i32, %arg1: memref<32x64xf32, #tpu.memory_space<vmem>>, %arg2: memref<64x32xf32, #tpu.memory_space<vmem>>, %arg3: memref<1x32xf32, #tpu.memory_space<vmem>>, %arg4: memref<32x32xf32, #tpu.memory_space<vmem>>) attributes {dimension_semantics = [#tpu.dimension_semantics<parallel>], iteration_bounds = array<i64: 1>, scalar_prefetch = 0 : i64, scratch_operands = 0 : i64, tpu.core_type = #tpu.core_type<tc>, window_params = [{transform_indices = @transform_0, window_bounds = array<i64: 32, 64>}, {pipeline_mode = #tpu.pipeline_mode<synchronous>, transform_indices = @transform_1, window_bounds = array<i64: 64, 32>}, {pipeline_mode = #tpu.pipeline_mode<synchronous>, transform_indices = @transform_2, window_bounds = array<i64: 1, 32>}, {transform_indices = @transform_3, window_bounds = array<i64: 32, 32>}]} {
    %c0 = arith.constant 0 : index
    %c0_0 = arith.constant 0 : index
    %0 = vector.load %arg1[%c0, %c0_0] : memref<32x64xf32, #tpu.memory_space<vmem>>, vector<32x64xf32>
    %c0_1 = arith.constant 0 : index
    %c0_2 = arith.constant 0 : index
    %1 = vector.load %arg2[%c0_1, %c0_2] : memref<64x32xf32, #tpu.memory_space<vmem>>, vector<64x32xf32>
    %cst = arith.constant dense<0.000000e+00> : vector<32x32xf32>
    %2 = tpu.matmul %0, %1, %cst {dimension_numbers = #tpu.dot_dimension_numbers<[1], [0], [0], [1], [0, 0, 1, 1], [], []>} : vector<32x64xf32>, vector<64x32xf32>, vector<32x32xf32> -> vector<32x32xf32>
    %c0_3 = arith.constant 0 : index
    %c0_4 = arith.constant 0 : index
    %3 = vector.load %arg3[%c0_3, %c0_4] : memref<1x32xf32, #tpu.memory_space<vmem>>, vector<1x32xf32>
    %4 = vector.broadcast %3 : vector<1x32xf32> to vector<32x32xf32>
    %5 = arith.addf %2, %4 : vector<32x32xf32>
    %c0_5 = arith.constant 0 : index
    %c0_6 = arith.constant 0 : index
    %6 = vector.load %arg4[%c0_5, %c0_6] : memref<32x32xf32, #tpu.memory_space<vmem>>, vector<32x32xf32>
    tpu.vector_store %arg4[%c0_5, %c0_6], %5 {strides = array<i32>} : memref<32x32xf32, #tpu.memory_space<vmem>>, vector<32x32xf32>,
    return
  }
  func.func @transform_0(%arg0: i32) -> (i32, i32) {
    %c0_i32 = arith.constant 0 : i32
    %c0_i32_0 = arith.constant 0 : i32
    return %arg0, %c0_i32 : i32, i32
  }
  func.func @transform_1(%arg0: i32) -> (i32, i32) {
    %c0_i32 = arith.constant 0 : i32
    %c0_i32_0 = arith.constant 0 : i32
    %c0_i32_1 = arith.constant 0 : i32
    return %c0_i32, %c0_i32_0 : i32, i32
  }
  func.func @transform_2(%arg0: i32) -> (i32, i32) {
    %c0_i32 = arith.constant 0 : i32
    %c0_i32_0 = arith.constant 0 : i32
    %c0_i32_1 = arith.constant 0 : i32
    return %c0_i32, %c0_i32_0 : i32, i32
  }
  func.func @transform_3(%arg0: i32) -> (i32, i32) {
    %c0_i32 = arith.constant 0 : i32
    %c0_i32_0 = arith.constant 0 : i32
    return %arg0, %c0_i32 : i32, i32
  }
}

</mosaic_0001>

<llo_original>
// kernel: tpu_custom_call.1
$region0: #{tpu_custom_call.1}
  #allocation0 [shape = 'u32[]', space=smem, size = 0x4, offset = 0x4, fixed_abs, tag = 'smem constant byte address 0x4 - core index']
  #allocation1 [shape = 'u32[144,128]{1,0:T(1,128)}', space=vmem, size = 0x12000, scoped, tag = 'internal scratch']
  %s0 = inlined_call_operand.vmem [shape: f32[32,64], index: 0, kind: input, shape index: {}]
  %s1 = inlined_call_operand.vmem [shape: f32[64,32], index: 1, kind: input, shape index: {}]
  %s2 = inlined_call_operand.vmem [shape: f32[1,32], index: 2, kind: input, shape index: {}]
  %s3 = inlined_call_operand.hbm [shape: f32[32,32], index: 3, kind: output, shape index: {}]
  %s4 = sld [smem:[#allocation0]]
  $region22: #{tpu_custom_call.1} parent=0
    _
  %s6 = ssub.s32 1, %s4
  %s7 = scalar_select 0, %s6, %s4
  $region1: #{tpu_custom_call.1} parent=0
    #allocation2 [shape = 'u8[16384]{0}', space=vmem, size = 0x4000, scoped, tag = 'output window, operand 0, single buffered']
    #allocation3 [shape = 's32[1]{0}', space=sflag, size = 0x4, scoped, tag = 'scoped memory for tpu_custom_call.1']
    %8 = vsyncpa [#allocation3], 0
    // Predicated region
    $region2: #{tpu_custom_call.1} parent=1 // pred_check
      _
    $region3: #{tpu_custom_call.1} parent=1 // pred_check_branch
      %10 = sbr.rel (0) target = $region5
    $region4: #{tpu_custom_call.1} parent=1 // pred_region
      _
    $region5: #{tpu_custom_call.1} parent=1 // pred_fallthru
      _
    // Predicated region
    $region6: #{tpu_custom_call.1} parent=1 // pred_check
      _
    $region7: #{tpu_custom_call.1} parent=1 // pred_check_branch
      %12 = sbr.rel (0) target = $region9
    $region8: #{tpu_custom_call.1} parent=1 // pred_region
      _
    $region9: #{tpu_custom_call.1} parent=1 // pred_fallthru
      _
    // Predicated region
    $region10: #{tpu_custom_call.1} parent=1 // pred_check
      _
    $region11: #{tpu_custom_call.1} parent=1 // pred_check_branch
      %14 = sbr.rel (0) target = $region13
    $region12: #{tpu_custom_call.1} parent=1 // pred_region
      _
    $region13: #{tpu_custom_call.1} parent=1 // pred_fallthru
      _
    %v15 = vld [vmem:[%s0] sm:$0xff]
    %v16 = vld [vmem:[%s0 + $0x8] sm:$0xff]
    %v17 = vld [vmem:[%s0 + $0x10] sm:$0xff]
    %v18 = vld [vmem:[%s0 + $0x18] sm:$0xff]
    %v19 = vld [vmem:[%s1] sm:$0xff]
    %v20 = vld [vmem:[%s1 + $0x8] sm:$0xff]
    %v21 = vld [vmem:[%s1 + $0x10] sm:$0xff]
    %v22 = vld [vmem:[%s1 + $0x18] sm:$0xff]
    %v23 = vld [vmem:[%s1 + $0x20] sm:$0xff]
    %v24 = vld [vmem:[%s1 + $0x28] sm:$0xff]
    %v25 = vld [vmem:[%s1 + $0x30] sm:$0xff]
    %v26 = vld [vmem:[%s1 + $0x38] sm:$0xff]
    %v27 = vld [vmem:[%s2] sm:$0x1]
    %v29 = vlaneseq
    %v30 = vshrl.u32 %v29, 7
    %v31 = vsub.s32 0, %v30
    %v32 = vrot.slane %v27, %v31
    %vm34 = vcmask 523264
    %v36 = vsel %vm34, %v15, 0
    %v39 = vsel %vm34, %v16, 0
    %v42 = vsel %vm34, %v17, 0
    %v45 = vsel %vm34, %v18, 0
    %47 = vmatprep.subr.mxu0 0.0
    %48 = vmatpush1.msra.mxu0 0.0
    %49 = vmatprep.subr.mxu0 0.0
    %50 = vmatpush1.msra.mxu0 0.0
    %51 = vmatprep.subr.mxu0 0.0
    %52 = vmatpush1.msra.mxu0 0.0
    %53 = vmatprep.subr.mxu0 0.0
    %54 = vmatpush1.msra.mxu0 0.0
    %55 = vmatprep.subr.mxu0 0.0
    %56 = vmatpush1.msra.mxu0 0.0
    %57 = vmatprep.subr.mxu0 0.0
    %58 = vmatpush1.msra.mxu0 0.0
    %59 = vmatprep.subr.mxu0 0.0
    %60 = vmatpush1.msra.mxu0 0.0
    %61 = vmatprep.subr.mxu0 0.0
    %62 = vmatpush1.msra.mxu0 0.0
    %63 = vmatprep.subr.mxu0 0.0
    %64 = vmatpush1.msra.mxu0 %v26
    %65 = vmatprep.subr.mxu0 0.0
    %66 = vmatpush1.msra.mxu0 %v25
    %67 = vmatprep.subr.mxu0 0.0
    %68 = vmatpush1.msra.mxu0 %v24
    %69 = vmatprep.subr.mxu0 0.0
    %70 = vmatpush1.msra.mxu0 %v23
    %71 = vmatprep.subr.mxu0 0.0
    %72 = vmatpush1.msra.mxu0 %v22
    %73 = vmatprep.subr.mxu0 0.0
    %74 = vmatpush1.msra.mxu0 %v21
    %75 = vmatprep.subr.mxu0 0.0
    %76 = vmatpush1.msra.mxu0 %v20
    %77 = vmatprep.subr.mxu0 0.0
    %78 = vmatpush1.msra.mxu0 %v19
    %79 = vmatprep.subr.mxu0 0.0
    %80 = vmatpush2.msra.mxu0 0.0
    %81 = vmatprep.subr.mxu0 0.0
    %82 = vmatpush2.msra.mxu0 0.0
    %83 = vmatprep.subr.mxu0 0.0
    %84 = vmatpush2.msra.mxu0 0.0
    %85 = vmatprep.subr.mxu0 0.0
    %86 = vmatpush2.msra.mxu0 0.0
    %87 = vmatprep.subr.mxu0 0.0
    %88 = vmatpush2.msra.mxu0 0.0
    %89 = vmatprep.subr.mxu0 0.0
    %90 = vmatpush2.msra.mxu0 0.0
    %91 = vmatprep.subr.mxu0 0.0
    %92 = vmatpush2.msra.mxu0 0.0
    %93 = vmatprep.subr.mxu0 0.0
    %94 = vmatpush2.msra.mxu0 0.0
    %95 = vmatprep.subr.mxu0 0.0
    %96 = vmatpush2.msra.mxu0 0.0
    %97 = vmatprep.subr.mxu0 0.0
    %98 = vmatpush2.msra.mxu0 0.0
    %99 = vmatprep.subr.mxu0 0.0
    %100 = vmatpush2.msra.mxu0 0.0
    %101 = vmatprep.subr.mxu0 0.0
    %102 = vmatpush2.msra.mxu0 0.0
    %103 = vmatprep.subr.mxu0 0.0
    %104 = vmatpush2.msra.mxu0 0.0
    %105 = vmatprep.subr.mxu0 0.0
    %106 = vmatpush2.msra.mxu0 0.0
    %107 = vmatprep.subr.mxu0 0.0
    %108 = vmatpush2.msra.mxu0 0.0
    %109 = vmatprep.subr.mxu0 0.0
    %110 = vmatpush2.msra.mxu0 0.0
    %111 = vmatprep.mubr.f32.mxu0 0.0
    %112 = vmatmul.mubr.f32.gmra.mxu0 %v36
    %v113 = vpop.f32.mrf.mxu0
    %v114 = vadd.f32 %v32, %v113
    %v115 = vpop.f32.mrf.mxu0
    %116 = vmatprep.mubr.f32.mxu0 0.0
    %117 = vmatmul.mubr.f32.gmra.mxu0 %v39
    %v118 = vpop.f32.mrf.mxu0
    %v119 = vadd.f32 %v32, %v118
    %v120 = vpop.f32.mrf.mxu0
    %121 = vmatprep.mubr.f32.mxu0 0.0
    %122 = vmatmul.mubr.f32.gmra.mxu0 %v42
    %v123 = vpop.f32.mrf.mxu0
    %v124 = vadd.f32 %v32, %v123
    %v125 = vpop.f32.mrf.mxu0
    %126 = vmatprep.mubr.f32.mxu0 0.0
    %127 = vmatmul.mubr.f32.gmra.mxu0 %v45
    %v128 = vpop.f32.mrf.mxu0
    %v129 = vadd.f32 %v32, %v128
    %v130 = vpop.f32.mrf.mxu0
    %131 = vdwg.mxu0
    %vm132 = vcmask 261120
    %133 = vst.msk [vmem:[#allocation2] sm:$0xff] %vm132, %v114
    %134 = vst.msk [vmem:[#allocation2 + $0x8] sm:$0xff] %vm132, %v119
    %135 = vst.msk [vmem:[#allocation2 + $0x10] sm:$0xff] %vm132, %v124
    %136 = vst.msk [vmem:[#allocation2 + $0x18] sm:$0xff] %vm132, %v129
    // Predicated region
    $region14: #{tpu_custom_call.1} parent=1 // pred_check
      _
    $region15: #{tpu_custom_call.1} parent=1 // pred_check_branch
      %138 = sbr.rel (0) target = $region17
    $region16: #{tpu_custom_call.1} parent=1 // pred_region
      %s140 = ssub.s32 512, 512
      %141 = vsyncadd [#allocation3], %s140
      %s142 = sshll.u32 [#allocation2], 4
      %s143 = int_to_ptr.vmem [resolvable:$true] %s142
      %148 = dma.vmem_to_hbm [thread:$0]  %s143, 512, %s3, [#allocation3], 128, 128, 8
    $region17: #{tpu_custom_call.1} parent=1 // pred_fallthru
      _
    // Predicated region
    $region18: #{tpu_custom_call.1} parent=1 // pred_check
      _
    $region19: #{tpu_custom_call.1} parent=1 // pred_check_branch
      %150 = sbr.rel (0) target = $region21
    $region20: #{tpu_custom_call.1} parent=1 // pred_region
      %151 = dma.done [#allocation3], 512
    $region21: #{tpu_custom_call.1} parent=1 // pred_fallthru
      _
    %152 = vsyncpa [#allocation3], 1

</llo_original>
